<compile_context>
chip_gen: v5e
topology: v5e:2x2
jax: 0.10.0
libtpu: 0.0.40
codegen_flags: <defaults>
</compile_context>

<pallas_src>
import functools
import math

import jax
import jax.numpy as jnp
from jax import lax
from jax.experimental import pallas as pl
from jax.experimental.pallas import tpu as pltpu


def _pick_batch_block(B):
    """Batch rows per grid step. Split only when it keeps (8,128) alignment."""
    return 8 if (B > 8 and B % 8 == 0) else B


def _pick_time_block(T, H, Bb):
    """Timesteps per grid step. Whole (small) sequence in one block; otherwise a
    cap derived from a ~4 MiB budget for the staged gate projection, rounded so
    Tb*H stays a multiple of 128 lanes (lane-aligned output blocks)."""
    budget = 4 * 1024 * 1024                       # bytes for gx scratch (f32)
    cap = max(8, budget // (Bb * 4 * H * 4))
    cap = min(cap, 256)
    if T <= cap:
        return T
    q = 128 // math.gcd(H, 128)                    # Tb multiple that makes Tb*H % 128 == 0
    return max(q, (cap // q) * q)


def _pick_store_group(Tb, H):
    """Timesteps grouped per output store so the store is ~128 lanes wide."""
    gmax = max(1, 128 // H)
    for d in range(min(gmax, Tb), 0, -1):
        if Tb % d == 0:
            return d
    return 1


def lstm_kernel(group, x_ref, wih_ref, whh_ref, b_ref, out_ref,
                h_sc, c_sc, gx_sc):
    # x_ref:   (Tb, Bb, I)  time-major block of inputs
    # wih_ref: (I, 4H)      input->gate weights (gate order i,f,g,o)
    # whh_ref: (H, 4H)      hidden->gate weights
    # b_ref:   (1, 4H)      b_ih + b_hh
    # out_ref: (Bb, Tb*H)   lane-dense output slab for this block
    # h_sc/c_sc: (Bb, H) f32 recurrent state carried across time blocks
    # gx_sc:   (Tb, Bb, 4H) f32 staged input projection (time-major)
    Tb, Bb, I = x_ref.shape
    H = h_sc.shape[-1]
    H4 = 4 * H
    G = group
    ntrips = Tb // G

    @pl.when(pl.program_id(1) == 0)
    def _():
        h_sc[...] = jnp.zeros_like(h_sc)
        c_sc[...] = jnp.zeros_like(c_sc)

    # Phase 1 (off the serial path): one big MXU matmul for the whole block's
    # input projection, bias folded in, staged time-major in VMEM.
    x2 = x_ref[...].reshape(Tb * Bb, I)
    gx = jnp.dot(x2, wih_ref[...], preferred_element_type=jnp.float32) + b_ref[...]
    gx_sc[...] = gx.reshape(Tb, Bb, H4)

    whh = whh_ref[...]          # hoisted: loaded once, reused every step
    # TODO(synk): keep W_hh resident in the MXU across the loop via
    # pltpu.matmul_push_rhs / matmul_acc_lhs / matmul_pop (and accumulate
    # gx[t] in place in the MRB on v7x) instead of re-issuing jnp.dot each step.

    def step_group(g, carry):
        h, c = carry
        base = pl.multiple_of(g * G, G)
        outs = []
        for j in range(G):                              # G consecutive timesteps
            gates = gx_sc[base + j] + jnp.dot(h, whh,
                                              preferred_element_type=jnp.float32)
            if H >= 128:
                # split activations: EUP only does 4H work instead of 8H
                if_s = jax.nn.sigmoid(gates[:, :2 * H])
                i_g = if_s[:, :H]
                f_g = if_s[:, H:]
                g_g = jnp.tanh(gates[:, 2 * H:3 * H])
                o_g = jax.nn.sigmoid(gates[:, 3 * H:])
            else:
                # whole 4H block is ~one vreg: one pass of each is cheapest
                sig = jax.nn.sigmoid(gates)
                tnh = jnp.tanh(gates)
                i_g = sig[:, 0 * H:1 * H]
                f_g = sig[:, 1 * H:2 * H]
                g_g = tnh[:, 2 * H:3 * H]
                o_g = sig[:, 3 * H:4 * H]
            c = f_g * c + i_g * g_g
            h = o_g * jnp.tanh(c)
            outs.append(h)
        # one full-lane-width store per group of G timesteps
        out_blk = outs[0] if G == 1 else jnp.concatenate(outs, axis=-1)
        off = pl.multiple_of(g * (G * H), G * H)
        out_ref[:, pl.ds(off, G * H)] = out_blk.astype(out_ref.dtype)
        return (h, c)

    unroll = max(1, min(ntrips, max(1, 8 // G)))
    h_fin, c_fin = lax.fori_loop(0, ntrips, step_group,
                                 (h_sc[...], c_sc[...]), unroll=unroll)
    h_sc[...] = h_fin
    c_sc[...] = c_fin


def lstm_forward_pallas(x, w_ih, w_hh, b_ih, b_hh):
    """x: (B, T, I). Weights in PyTorch layout:
       w_ih: (4H, I), w_hh: (4H, H), b_ih/b_hh: (4H,). Returns (B, T, H)."""
    B, T, I = x.shape
    H4 = w_ih.shape[0]
    H = H4 // 4

    wih_t = jnp.transpose(w_ih, (1, 0))              # (I, 4H)  tiny, one-time
    whh_t = jnp.transpose(w_hh, (1, 0))              # (H, 4H)
    bias = (b_ih + b_hh).reshape(1, H4)              # (1, 4H)

    Bb = _pick_batch_block(B)
    Tb = _pick_time_block(T, H, Bb)
    T_pad = -(-T // Tb) * Tb
    if T_pad != T:
        x = jnp.pad(x, ((0, 0), (0, T_pad - T), (0, 0)))
    x_tm = jnp.transpose(x, (1, 0, 2))               # (T_pad, B, I) time-major

    G = _pick_store_group(Tb, H)
    nb_b = B // Bb
    nb_t = T_pad // Tb

    kernel = functools.partial(lstm_kernel, G)

    # TODO(synk): for very large I/H on v7x (64 MiB VMEM), single-buffer the
    # grid-invariant weight specs (pipeline_mode=pl.Buffered(1)) or tile 4H.
    out_flat = pl.pallas_call(
        kernel,
        out_shape=jax.ShapeDtypeStruct((B, T_pad * H), x.dtype),
        grid_spec=pltpu.PrefetchScalarGridSpec(
            num_scalar_prefetch=0,
            grid=(nb_b, nb_t),
            in_specs=[
                pl.BlockSpec((Tb, Bb, I), lambda b, t: (t, b, 0)),
                pl.BlockSpec((I, H4), lambda b, t: (0, 0)),
                pl.BlockSpec((H, H4), lambda b, t: (0, 0)),
                pl.BlockSpec((1, H4), lambda b, t: (0, 0)),
            ],
            out_specs=pl.BlockSpec((Bb, Tb * H), lambda b, t: (b, t)),
            scratch_shapes=[
                pltpu.VMEM((Bb, H), jnp.float32),        # h state
                pltpu.VMEM((Bb, H), jnp.float32),        # c state
                pltpu.VMEM((Tb, Bb, H4), jnp.float32),   # staged gate projection
            ],
        ),
        compiler_params=pltpu.CompilerParams(
            dimension_semantics=("parallel", "arbitrary"),  # batch parallel, time serial
            vmem_limit_bytes=48 * 1024 * 1024,
        ),
    )(x_tm, wih_t, whh_t, bias)

    out = out_flat.reshape(B, T_pad, H)               # free: contiguous reshape
    if T_pad != T:
        out = out[:, :T, :]
    return out


class RNNPallas:
    """Mirror of the PyTorch RNN module (rnn_cell='lstm', n_layers=1, birnn=False)."""

    def __init__(self, input_size, hidden_size, key):
        self.input_size = input_size
        self.hidden_size = hidden_size
        k = 1.0 / jnp.sqrt(hidden_size)
        ks = jax.random.split(key, 4)
        self.w_ih = jax.random.uniform(ks[0], (4 * hidden_size, input_size),
                                       jnp.float32, -k, k)
        self.w_hh = jax.random.uniform(ks[1], (4 * hidden_size, hidden_size),
                                       jnp.float32, -k, k)
        self.b_ih = jax.random.uniform(ks[2], (4 * hidden_size,), jnp.float32, -k, k)
        self.b_hh = jax.random.uniform(ks[3], (4 * hidden_size,), jnp.float32, -k, k)

    def forward(self, x):
        output_x = lstm_forward_pallas(x, self.w_ih, self.w_hh, self.b_ih, self.b_hh)
        return [output_x]


def lstm_reference(x, w_ih, w_hh, b_ih, b_hh):
    """Pure-JAX reference (lax.scan) matching PyTorch nn.LSTM semantics."""
    B, T, I = x.shape
    H = w_hh.shape[1]
    bias = b_ih + b_hh

    def step(carry, xt):
        h, c = carry
        gates = xt @ w_ih.T + h @ w_hh.T + bias
        i_g = jax.nn.sigmoid(gates[:, 0 * H:1 * H])
        f_g = jax.nn.sigmoid(gates[:, 1 * H:2 * H])
        g_g = jnp.tanh(gates[:, 2 * H:3 * H])
        o_g = jax.nn.sigmoid(gates[:, 3 * H:4 * H])
        c_new = f_g * c + i_g * g_g
        h_new = o_g * jnp.tanh(c_new)
        return (h_new, c_new), h_new

    h0 = jnp.zeros((B, H), jnp.float32)
    c0 = jnp.zeros((B, H), jnp.float32)
    (_, _), ys = lax.scan(step, (h0, c0), jnp.transpose(x, (1, 0, 2)))
    return jnp.transpose(ys, (1, 0, 2))


if __name__ == "__main__":
    # config: rnn_cell='lstm', input_size=16, hidden_size=32, n_layers=1, birnn=False
    B, T, I, H = 2, 8, 16, 32
    key = jax.random.PRNGKey(0)
    k_x, k_w = jax.random.split(key)
    x = jax.random.normal(k_x, (B, T, I), jnp.float32)

    model = RNNPallas(input_size=I, hidden_size=H, key=k_w)
    out = model.forward(x)[0]
    out = jax.block_until_ready(out)

    ref = lstm_reference(x, model.w_ih, model.w_hh, model.b_ih, model.b_hh)
    assert out.shape == (B, T, H)
    assert jnp.allclose(out, ref, atol=3e-5, rtol=3e-5)

    print("KERNEL_OK")
</pallas_src>

<mosaic_0001>
module attributes {stable_mosaic.version = 11 : i64} {
  func.func @lstm_kernel(%arg0: i32, %arg1: i32, %arg2: memref<8x2x16xf32, #tpu.memory_space<vmem>>, %arg3: memref<16x128xf32, #tpu.memory_space<vmem>>, %arg4: memref<32x128xf32, #tpu.memory_space<vmem>>, %arg5: memref<1x128xf32, #tpu.memory_space<vmem>>, %arg6: memref<2x256xf32, #tpu.memory_space<vmem>>, %arg7: memref<2x32xf32, #tpu.memory_space<vmem>>, %arg8: memref<2x32xf32, #tpu.memory_space<vmem>>, %arg9: memref<8x2x128xf32, #tpu.memory_space<vmem>>) attributes {dimension_semantics = [#tpu.dimension_semantics<parallel>, #tpu.dimension_semantics<arbitrary>], iteration_bounds = array<i64: 1, 1>, scalar_prefetch = 0 : i64, scratch_operands = 3 : i64, tpu.core_type = #tpu.core_type<tc>, window_params = [{transform_indices = @transform_0, window_bounds = array<i64: 8, 2, 16>}, {pipeline_mode = #tpu.pipeline_mode<synchronous>, transform_indices = @transform_1, window_bounds = array<i64: 16, 128>}, {pipeline_mode = #tpu.pipeline_mode<synchronous>, transform_indices = @transform_2, window_bounds = array<i64: 32, 128>}, {pipeline_mode = #tpu.pipeline_mode<synchronous>, transform_indices = @transform_3, window_bounds = array<i64: 1, 128>}, {transform_indices = @transform_4, window_bounds = array<i64: 2, 256>}]} {
    %c0_i32 = arith.constant 0 : i32
    %0 = arith.cmpi eq, %arg1, %c0_i32 : i32
    %1 = arith.extui %0 : i1 to i32
    %c0_i32_0 = arith.constant 0 : i32
    %2 = arith.cmpi ne, %1, %c0_i32_0 : i32
    scf.if %2 {
      %cst_64 = arith.constant 0.000000e+00 : f32
      %199 = vector.broadcast %cst_64 : f32 to vector<2x32xf32>
      %c0_65 = arith.constant 0 : index
      %c0_66 = arith.constant 0 : index
      %200 = vector.load %arg7[%c0_65, %c0_66] : memref<2x32xf32, #tpu.memory_space<vmem>>, vector<2x32xf32>
      tpu.vector_store %arg7[%c0_65, %c0_66], %199 {strides = array<i32>} : memref<2x32xf32, #tpu.memory_space<vmem>>, vector<2x32xf32>,
      %cst_67 = arith.constant 0.000000e+00 : f32
      %201 = vector.broadcast %cst_67 : f32 to vector<2x32xf32>
      %c0_68 = arith.constant 0 : index
      %c0_69 = arith.constant 0 : index
      %202 = vector.load %arg8[%c0_68, %c0_69] : memref<2x32xf32, #tpu.memory_space<vmem>>, vector<2x32xf32>
      tpu.vector_store %arg8[%c0_68, %c0_69], %201 {strides = array<i32>} : memref<2x32xf32, #tpu.memory_space<vmem>>, vector<2x32xf32>,
    } else {
    }
    %c0 = arith.constant 0 : index
    %c0_1 = arith.constant 0 : index
    %c0_2 = arith.constant 0 : index
    %3 = vector.load %arg2[%c0, %c0_1, %c0_2] : memref<8x2x16xf32, #tpu.memory_space<vmem>>, vector<8x2x16xf32>
    %4 = vector.shape_cast %3 : vector<8x2x16xf32> to vector<16x16xf32>
    %c0_3 = arith.constant 0 : index
    %c0_4 = arith.constant 0 : index
    %5 = vector.load %arg3[%c0_3, %c0_4] : memref<16x128xf32, #tpu.memory_space<vmem>>, vector<16x128xf32>
    %cst = arith.constant dense<0.000000e+00> : vector<16x128xf32>
    %6 = tpu.matmul %4, %5, %cst {dimension_numbers = #tpu.dot_dimension_numbers<[1], [0], [0], [1], [0, 0, 1, 1], [], []>} : vector<16x16xf32>, vector<16x128xf32>, vector<16x128xf32> -> vector<16x128xf32>
    %c0_5 = arith.constant 0 : index
    %c0_6 = arith.constant 0 : index
    %7 = vector.load %arg5[%c0_5, %c0_6] : memref<1x128xf32, #tpu.memory_space<vmem>>, vector<1x128xf32>
    %8 = vector.broadcast %7 : vector<1x128xf32> to vector<16x128xf32>
    %9 = arith.addf %6, %8 : vector<16x128xf32>
    %10 = vector.shape_cast %9 : vector<16x128xf32> to vector<8x2x128xf32>
    %c0_7 = arith.constant 0 : index
    %c0_8 = arith.constant 0 : index
    %c0_9 = arith.constant 0 : index
    %11 = vector.load %arg9[%c0_7, %c0_8, %c0_9] : memref<8x2x128xf32, #tpu.memory_space<vmem>>, vector<8x2x128xf32>
    tpu.vector_store %arg9[%c0_7, %c0_8, %c0_9], %10 {strides = array<i32>} : memref<8x2x128xf32, #tpu.memory_space<vmem>>, vector<8x2x128xf32>,
    %c0_10 = arith.constant 0 : index
    %c0_11 = arith.constant 0 : index
    %12 = vector.load %arg4[%c0_10, %c0_11] : memref<32x128xf32, #tpu.memory_space<vmem>>, vector<32x128xf32>
    %c0_12 = arith.constant 0 : index
    %c0_13 = arith.constant 0 : index
    %13 = vector.load %arg7[%c0_12, %c0_13] : memref<2x32xf32, #tpu.memory_space<vmem>>, vector<2x32xf32>
    %c0_14 = arith.constant 0 : index
    %c0_15 = arith.constant 0 : index
    %14 = vector.load %arg8[%c0_14, %c0_15] : memref<2x32xf32, #tpu.memory_space<vmem>>, vector<2x32xf32>
    %c0_i32_16 = arith.constant 0 : i32
    %c4_i32 = arith.constant 4 : i32
    %15 = arith.muli %c0_i32_16, %c4_i32 : i32
    %16 = tpu.assume_multiple %15, 4 : i32
    %c0_i32_17 = arith.constant 0 : i32
    %17 = arith.addi %16, %c0_i32_17 : i32
    %18 = arith.index_cast %17 : i32 to index
    %c0_18 = arith.constant 0 : index
    %c0_19 = arith.constant 0 : index
    %19 = vector.load %arg9[%18, %c0_18, %c0_19] : memref<8x2x128xf32, #tpu.memory_space<vmem>>, vector<1x2x128xf32>
    %20 = vector.shape_cast %19 : vector<1x2x128xf32> to vector<2x128xf32>
    %cst_20 = arith.constant dense<0.000000e+00> : vector<2x128xf32>
    %21 = tpu.matmul %13, %12, %cst_20 {dimension_numbers = #tpu.dot_dimension_numbers<[1], [0], [0], [1], [0, 0, 1, 1], [], []>} : vector<2x32xf32>, vector<32x128xf32>, vector<2x128xf32> -> vector<2x128xf32>
    %22 = arith.addf %20, %21 : vector<2x128xf32>
    %23 = arith.negf %22 : vector<2x128xf32>
    %24 = math.exp %23 : vector<2x128xf32>
    %cst_21 = arith.constant 1.000000e+00 : f32
    %25 = vector.broadcast %cst_21 : f32 to vector<2x128xf32>
    %26 = arith.addf %25, %24 : vector<2x128xf32>
    %27 = arith.divf %25, %26 : vector<2x128xf32>
    %28 = math.tanh %22 : vector<2x128xf32>
    %29 = vector.extract_strided_slice %27 {offsets = [0, 0], sizes = [2, 32], strides = [1, 1]} : vector<2x128xf32> to vector<2x32xf32>
    %30 = vector.extract_strided_slice %27 {offsets = [0, 32], sizes = [2, 32], strides = [1, 1]} : vector<2x128xf32> to vector<2x32xf32>
    %31 = vector.extract_strided_slice %28 {offsets = [0, 64], sizes = [2, 32], strides = [1, 1]} : vector<2x128xf32> to vector<2x32xf32>
    %32 = vector.extract_strided_slice %27 {offsets = [0, 96], sizes = [2, 32], strides = [1, 1]} : vector<2x128xf32> to vector<2x32xf32>
    %33 = arith.mulf %30, %14 : vector<2x32xf32>
    %34 = arith.mulf %29, %31 : vector<2x32xf32>
    %35 = arith.addf %33, %34 : vector<2x32xf32>
    %36 = math.tanh %35 : vector<2x32xf32>
    %37 = arith.mulf %32, %36 : vector<2x32xf32>
    %c1_i32 = arith.constant 1 : i32
    %38 = arith.addi %16, %c1_i32 : i32
    %39 = arith.index_cast %38 : i32 to index
    %c0_22 = arith.constant 0 : index
    %c0_23 = arith.constant 0 : index
    %40 = vector.load %arg9[%39, %c0_22, %c0_23] : memref<8x2x128xf32, #tpu.memory_space<vmem>>, vector<1x2x128xf32>
    %41 = vector.shape_cast %40 : vector<1x2x128xf32> to vector<2x128xf32>
    %cst_24 = arith.constant dense<0.000000e+00> : vector<2x128xf32>
    %42 = tpu.matmul %37, %12, %cst_24 {dimension_numbers = #tpu.dot_dimension_numbers<[1], [0], [0], [1], [0, 0, 1, 1], [], []>} : vector<2x32xf32>, vector<32x128xf32>, vector<2x128xf32> -> vector<2x128xf32>
    %43 = arith.addf %41, %42 : vector<2x128xf32>
    %44 = arith.negf %43 : vector<2x128xf32>
    %45 = math.exp %44 : vector<2x128xf32>
    %cst_25 = arith.constant 1.000000e+00 : f32
    %46 = vector.broadcast %cst_25 : f32 to vector<2x128xf32>
    %47 = arith.addf %46, %45 : vector<2x128xf32>
    %48 = arith.divf %46, %47 : vector<2x128xf32>
    %49 = math.tanh %43 : vector<2x128xf32>
    %50 = vector.extract_strided_slice %48 {offsets = [0, 0], sizes = [2, 32], strides = [1, 1]} : vector<2x128xf32> to vector<2x32xf32>
    %51 = vector.extract_strided_slice %48 {offsets = [0, 32], sizes = [2, 32], strides = [1, 1]} : vector<2x128xf32> to vector<2x32xf32>
    %52 = vector.extract_strided_slice %49 {offsets = [0, 64], sizes = [2, 32], strides = [1, 1]} : vector<2x128xf32> to vector<2x32xf32>
    %53 = vector.extract_strided_slice %48 {offsets = [0, 96], sizes = [2, 32], strides = [1, 1]} : vector<2x128xf32> to vector<2x32xf32>
    %54 = arith.mulf %51, %35 : vector<2x32xf32>
    %55 = arith.mulf %50, %52 : vector<2x32xf32>
    %56 = arith.addf %54, %55 : vector<2x32xf32>
    %57 = math.tanh %56 : vector<2x32xf32>
    %58 = arith.mulf %53, %57 : vector<2x32xf32>
    %c2_i32 = arith.constant 2 : i32
    %59 = arith.addi %16, %c2_i32 : i32
    %60 = arith.index_cast %59 : i32 to index
    %c0_26 = arith.constant 0 : index
    %c0_27 = arith.constant 0 : index
    %61 = vector.load %arg9[%60, %c0_26, %c0_27] : memref<8x2x128xf32, #tpu.memory_space<vmem>>, vector<1x2x128xf32>
    %62 = vector.shape_cast %61 : vector<1x2x128xf32> to vector<2x128xf32>
    %cst_28 = arith.constant dense<0.000000e+00> : vector<2x128xf32>
    %63 = tpu.matmul %58, %12, %cst_28 {dimension_numbers = #tpu.dot_dimension_numbers<[1], [0], [0], [1], [0, 0, 1, 1], [], []>} : vector<2x32xf32>, vector<32x128xf32>, vector<2x128xf32> -> vector<2x128xf32>
    %64 = arith.addf %62, %63 : vector<2x128xf32>
    %65 = arith.negf %64 : vector<2x128xf32>
    %66 = math.exp %65 : vector<2x128xf32>
    %cst_29 = arith.constant 1.000000e+00 : f32
    %67 = vector.broadcast %cst_29 : f32 to vector<2x128xf32>
    %68 = arith.addf %67, %66 : vector<2x128xf32>
    %69 = arith.divf %67, %68 : vector<2x128xf32>
    %70 = math.tanh %64 : vector<2x128xf32>
    %71 = vector.extract_strided_slice %69 {offsets = [0, 0], sizes = [2, 32], strides = [1, 1]} : vector<2x128xf32> to vector<2x32xf32>
    %72 = vector.extract_strided_slice %69 {offsets = [0, 32], sizes = [2, 32], strides = [1, 1]} : vector<2x128xf32> to vector<2x32xf32>
    %73 = vector.extract_strided_slice %70 {offsets = [0, 64], sizes = [2, 32], strides = [1, 1]} : vector<2x128xf32> to vector<2x32xf32>
    %74 = vector.extract_strided_slice %69 {offsets = [0, 96], sizes = [2, 32], strides = [1, 1]} : vector<2x128xf32> to vector<2x32xf32>
    %75 = arith.mulf %72, %56 : vector<2x32xf32>
    %76 = arith.mulf %71, %73 : vector<2x32xf32>
    %77 = arith.addf %75, %76 : vector<2x32xf32>
    %78 = math.tanh %77 : vector<2x32xf32>
    %79 = arith.mulf %74, %78 : vector<2x32xf32>
    %c3_i32 = arith.constant 3 : i32
    %80 = arith.addi %16, %c3_i32 : i32
    %81 = arith.index_cast %80 : i32 to index
    %c0_30 = arith.constant 0 : index
    %c0_31 = arith.constant 0 : index
    %82 = vector.load %arg9[%81, %c0_30, %c0_31] : memref<8x2x128xf32, #tpu.memory_space<vmem>>, vector<1x2x128xf32>
    %83 = vector.shape_cast %82 : vector<1x2x128xf32> to vector<2x128xf32>
    %cst_32 = arith.constant dense<0.000000e+00> : vector<2x128xf32>
    %84 = tpu.matmul %79, %12, %cst_32 {dimension_numbers = #tpu.dot_dimension_numbers<[1], [0], [0], [1], [0, 0, 1, 1], [], []>} : vector<2x32xf32>, vector<32x128xf32>, vector<2x128xf32> -> vector<2x128xf32>
    %85 = arith.addf %83, %84 : vector<2x128xf32>
    %86 = arith.negf %85 : vector<2x128xf32>
    %87 = math.exp %86 : vector<2x128xf32>
    %cst_33 = arith.constant 1.000000e+00 : f32
    %88 = vector.broadcast %cst_33 : f32 to vector<2x128xf32>
    %89 = arith.addf %88, %87 : vector<2x128xf32>
    %90 = arith.divf %88, %89 : vector<2x128xf32>
    %91 = math.tanh %85 : vector<2x128xf32>
    %92 = vector.extract_strided_slice %90 {offsets = [0, 0], sizes = [2, 32], strides = [1, 1]} : vector<2x128xf32> to vector<2x32xf32>
    %93 = vector.extract_strided_slice %90 {offsets = [0, 32], sizes = [2, 32], strides = [1, 1]} : vector<2x128xf32> to vector<2x32xf32>
    %94 = vector.extract_strided_slice %91 {offsets = [0, 64], sizes = [2, 32], strides = [1, 1]} : vector<2x128xf32> to vector<2x32xf32>
    %95 = vector.extract_strided_slice %90 {offsets = [0, 96], sizes = [2, 32], strides = [1, 1]} : vector<2x128xf32> to vector<2x32xf32>
    %96 = arith.mulf %93, %77 : vector<2x32xf32>
    %97 = arith.mulf %92, %94 : vector<2x32xf32>
    %98 = arith.addf %96, %97 : vector<2x32xf32>
    %99 = math.tanh %98 : vector<2x32xf32>
    %100 = arith.mulf %95, %99 : vector<2x32xf32>
    %101 = tpu.concatenate %37, %58, %79, %100 in 1 : vector<2x32xf32>, vector<2x32xf32>, vector<2x32xf32>, vector<2x32xf32> -> vector<2x128xf32>
    %c128_i32 = arith.constant 128 : i32
    %102 = arith.muli %c0_i32_16, %c128_i32 : i32
    %103 = tpu.assume_multiple %102, 128 : i32
    %c0_34 = arith.constant 0 : index
    %104 = arith.index_cast %103 : i32 to index
    %105 = vector.load %arg6[%c0_34, %104] : memref<2x256xf32, #tpu.memory_space<vmem>>, vector<2x128xf32>
    tpu.vector_store %arg6[%c0_34, %104], %101 {strides = array<i32>} : memref<2x256xf32, #tpu.memory_space<vmem>>, vector<2x128xf32>,
    %c1_i32_35 = arith.constant 1 : i32
    %c4_i32_36 = arith.constant 4 : i32
    %106 = arith.muli %c1_i32_35, %c4_i32_36 : i32
    %107 = tpu.assume_multiple %106, 4 : i32
    %c0_i32_37 = arith.constant 0 : i32
    %108 = arith.addi %107, %c0_i32_37 : i32
    %109 = arith.index_cast %108 : i32 to index
    %c0_38 = arith.constant 0 : index
    %c0_39 = arith.constant 0 : index
    %110 = vector.load %arg9[%109, %c0_38, %c0_39] : memref<8x2x128xf32, #tpu.memory_space<vmem>>, vector<1x2x128xf32>
    %111 = vector.shape_cast %110 : vector<1x2x128xf32> to vector<2x128xf32>
    %cst_40 = arith.constant dense<0.000000e+00> : vector<2x128xf32>
    %112 = tpu.matmul %100, %12, %cst_40 {dimension_numbers = #tpu.dot_dimension_numbers<[1], [0], [0], [1], [0, 0, 1, 1], [], []>} : vector<2x32xf32>, vector<32x128xf32>, vector<2x128xf32> -> vector<2x128xf32>
    %113 = arith.addf %111, %112 : vector<2x128xf32>
    %114 = arith.negf %113 : vector<2x128xf32>
    %115 = math.exp %114 : vector<2x128xf32>
    %cst_41 = arith.constant 1.000000e+00 : f32
    %116 = vector.broadcast %cst_41 : f32 to vector<2x128xf32>
    %117 = arith.addf %116, %115 : vector<2x128xf32>
    %118 = arith.divf %116, %117 : vector<2x128xf32>
    %119 = math.tanh %113 : vector<2x128xf32>
    %120 = vector.extract_strided_slice %118 {offsets = [0, 0], sizes = [2, 32], strides = [1, 1]} : vector<2x128xf32> to vector<2x32xf32>
    %121 = vector.extract_strided_slice %118 {offsets = [0, 32], sizes = [2, 32], strides = [1, 1]} : vector<2x128xf32> to vector<2x32xf32>
    %122 = vector.extract_strided_slice %119 {offsets = [0, 64], sizes = [2, 32], strides = [1, 1]} : vector<2x128xf32> to vector<2x32xf32>
    %123 = vector.extract_strided_slice %118 {offsets = [0, 96], sizes = [2, 32], strides = [1, 1]} : vector<2x128xf32> to vector<2x32xf32>
    %124 = arith.mulf %121, %98 : vector<2x32xf32>
    %125 = arith.mulf %120, %122 : vector<2x32xf32>
    %126 = arith.addf %124, %125 : vector<2x32xf32>
    %127 = math.tanh %126 : vector<2x32xf32>
    %128 = arith.mulf %123, %127 : vector<2x32xf32>
    %c1_i32_42 = arith.constant 1 : i32
    %129 = arith.addi %107, %c1_i32_42 : i32
    %130 = arith.index_cast %129 : i32 to index
    %c0_43 = arith.constant 0 : index
    %c0_44 = arith.constant 0 : index
    %131 = vector.load %arg9[%130, %c0_43, %c0_44] : memref<8x2x128xf32, #tpu.memory_space<vmem>>, vector<1x2x128xf32>
    %132 = vector.shape_cast %131 : vector<1x2x128xf32> to vector<2x128xf32>
    %cst_45 = arith.constant dense<0.000000e+00> : vector<2x128xf32>
    %133 = tpu.matmul %128, %12, %cst_45 {dimension_numbers = #tpu.dot_dimension_numbers<[1], [0], [0], [1], [0, 0, 1, 1], [], []>} : vector<2x32xf32>, vector<32x128xf32>, vector<2x128xf32> -> vector<2x128xf32>
    %134 = arith.addf %132, %133 : vector<2x128xf32>
    %135 = arith.negf %134 : vector<2x128xf32>
    %136 = math.exp %135 : vector<2x128xf32>
    %cst_46 = arith.constant 1.000000e+00 : f32
    %137 = vector.broadcast %cst_46 : f32 to vector<2x128xf32>
    %138 = arith.addf %137, %136 : vector<2x128xf32>
    %139 = arith.divf %137, %138 : vector<2x128xf32>
    %140 = math.tanh %134 : vector<2x128xf32>
    %141 = vector.extract_strided_slice %139 {offsets = [0, 0], sizes = [2, 32], strides = [1, 1]} : vector<2x128xf32> to vector<2x32xf32>
    %142 = vector.extract_strided_slice %139 {offsets = [0, 32], sizes = [2, 32], strides = [1, 1]} : vector<2x128xf32> to vector<2x32xf32>
    %143 = vector.extract_strided_slice %140 {offsets = [0, 64], sizes = [2, 32], strides = [1, 1]} : vector<2x128xf32> to vector<2x32xf32>
    %144 = vector.extract_strided_slice %139 {offsets = [0, 96], sizes = [2, 32], strides = [1, 1]} : vector<2x128xf32> to vector<2x32xf32>
    %145 = arith.mulf %142, %126 : vector<2x32xf32>
    %146 = arith.mulf %141, %143 : vector<2x32xf32>
    %147 = arith.addf %145, %146 : vector<2x32xf32>
    %148 = math.tanh %147 : vector<2x32xf32>
    %149 = arith.mulf %144, %148 : vector<2x32xf32>
    %c2_i32_47 = arith.constant 2 : i32
    %150 = arith.addi %107, %c2_i32_47 : i32
    %151 = arith.index_cast %150 : i32 to index
    %c0_48 = arith.constant 0 : index
    %c0_49 = arith.constant 0 : index
    %152 = vector.load %arg9[%151, %c0_48, %c0_49] : memref<8x2x128xf32, #tpu.memory_space<vmem>>, vector<1x2x128xf32>
    %153 = vector.shape_cast %152 : vector<1x2x128xf32> to vector<2x128xf32>
    %cst_50 = arith.constant dense<0.000000e+00> : vector<2x128xf32>
    %154 = tpu.matmul %149, %12, %cst_50 {dimension_numbers = #tpu.dot_dimension_numbers<[1], [0], [0], [1], [0, 0, 1, 1], [], []>} : vector<2x32xf32>, vector<32x128xf32>, vector<2x128xf32> -> vector<2x128xf32>
    %155 = arith.addf %153, %154 : vector<2x128xf32>
    %156 = arith.negf %155 : vector<2x128xf32>
    %157 = math.exp %156 : vector<2x128xf32>
    %cst_51 = arith.constant 1.000000e+00 : f32
    %158 = vector.broadcast %cst_51 : f32 to vector<2x128xf32>
    %159 = arith.addf %158, %157 : vector<2x128xf32>
    %160 = arith.divf %158, %159 : vector<2x128xf32>
    %161 = math.tanh %155 : vector<2x128xf32>
    %162 = vector.extract_strided_slice %160 {offsets = [0, 0], sizes = [2, 32], strides = [1, 1]} : vector<2x128xf32> to vector<2x32xf32>
    %163 = vector.extract_strided_slice %160 {offsets = [0, 32], sizes = [2, 32], strides = [1, 1]} : vector<2x128xf32> to vector<2x32xf32>
    %164 = vector.extract_strided_slice %161 {offsets = [0, 64], sizes = [2, 32], strides = [1, 1]} : vector<2x128xf32> to vector<2x32xf32>
    %165 = vector.extract_strided_slice %160 {offsets = [0, 96], sizes = [2, 32], strides = [1, 1]} : vector<2x128xf32> to vector<2x32xf32>
    %166 = arith.mulf %163, %147 : vector<2x32xf32>
    %167 = arith.mulf %162, %164 : vector<2x32xf32>
    %168 = arith.addf %166, %167 : vector<2x32xf32>
    %169 = math.tanh %168 : vector<2x32xf32>
    %170 = arith.mulf %165, %169 : vector<2x32xf32>
    %c3_i32_52 = arith.constant 3 : i32
    %171 = arith.addi %107, %c3_i32_52 : i32
    %172 = arith.index_cast %171 : i32 to index
    %c0_53 = arith.constant 0 : index
    %c0_54 = arith.constant 0 : index
    %173 = vector.load %arg9[%172, %c0_53, %c0_54] : memref<8x2x128xf32, #tpu.memory_space<vmem>>, vector<1x2x128xf32>
    %174 = vector.shape_cast %173 : vector<1x2x128xf32> to vector<2x128xf32>
    %cst_55 = arith.constant dense<0.000000e+00> : vector<2x128xf32>
    %175 = tpu.matmul %170, %12, %cst_55 {dimension_numbers = #tpu.dot_dimension_numbers<[1], [0], [0], [1], [0, 0, 1, 1], [], []>} : vector<2x32xf32>, vector<32x128xf32>, vector<2x128xf32> -> vector<2x128xf32>
    %176 = arith.addf %174, %175 : vector<2x128xf32>
    %177 = arith.negf %176 : vector<2x128xf32>
    %178 = math.exp %177 : vector<2x128xf32>
    %cst_56 = arith.constant 1.000000e+00 : f32
    %179 = vector.broadcast %cst_56 : f32 to vector<2x128xf32>
    %180 = arith.addf %179, %178 : vector<2x128xf32>
    %181 = arith.divf %179, %180 : vector<2x128xf32>
    %182 = math.tanh %176 : vector<2x128xf32>
    %183 = vector.extract_strided_slice %181 {offsets = [0, 0], sizes = [2, 32], strides = [1, 1]} : vector<2x128xf32> to vector<2x32xf32>
    %184 = vector.extract_strided_slice %181 {offsets = [0, 32], sizes = [2, 32], strides = [1, 1]} : vector<2x128xf32> to vector<2x32xf32>
    %185 = vector.extract_strided_slice %182 {offsets = [0, 64], sizes = [2, 32], strides = [1, 1]} : vector<2x128xf32> to vector<2x32xf32>
    %186 = vector.extract_strided_slice %181 {offsets = [0, 96], sizes = [2, 32], strides = [1, 1]} : vector<2x128xf32> to vector<2x32xf32>
    %187 = arith.mulf %184, %168 : vector<2x32xf32>
    %188 = arith.mulf %183, %185 : vector<2x32xf32>
    %189 = arith.addf %187, %188 : vector<2x32xf32>
    %190 = math.tanh %189 : vector<2x32xf32>
    %191 = arith.mulf %186, %190 : vector<2x32xf32>
    %192 = tpu.concatenate %128, %149, %170, %191 in 1 : vector<2x32xf32>, vector<2x32xf32>, vector<2x32xf32>, vector<2x32xf32> -> vector<2x128xf32>
    %c128_i32_57 = arith.constant 128 : i32
    %193 = arith.muli %c1_i32_35, %c128_i32_57 : i32
    %194 = tpu.assume_multiple %193, 128 : i32
    %c0_58 = arith.constant 0 : index
    %195 = arith.index_cast %194 : i32 to index
    %196 = vector.load %arg6[%c0_58, %195] : memref<2x256xf32, #tpu.memory_space<vmem>>, vector<2x128xf32>
    tpu.vector_store %arg6[%c0_58, %195], %192 {strides = array<i32>} : memref<2x256xf32, #tpu.memory_space<vmem>>, vector<2x128xf32>,
    %c2_i32_59 = arith.constant 2 : i32
    %c0_60 = arith.constant 0 : index
    %c0_61 = arith.constant 0 : index
    %197 = vector.load %arg7[%c0_60, %c0_61] : memref<2x32xf32, #tpu.memory_space<vmem>>, vector<2x32xf32>
    tpu.vector_store %arg7[%c0_60, %c0_61], %191 {strides = array<i32>} : memref<2x32xf32, #tpu.memory_space<vmem>>, vector<2x32xf32>,
    %c0_62 = arith.constant 0 : index
    %c0_63 = arith.constant 0 : index
    %198 = vector.load %arg8[%c0_62, %c0_63] : memref<2x32xf32, #tpu.memory_space<vmem>>, vector<2x32xf32>
    tpu.vector_store %arg8[%c0_62, %c0_63], %189 {strides = array<i32>} : memref<2x32xf32, #tpu.memory_space<vmem>>, vector<2x32xf32>,
    return
  }
  func.func @transform_0(%arg0: i32, %arg1: i32) -> (i32, i32, i32) {
    %c0_i32 = arith.constant 0 : i32
    %c0_i32_0 = arith.constant 0 : i32
    return %arg1, %arg0, %c0_i32 : i32, i32, i32
  }
  func.func @transform_1(%arg0: i32, %arg1: i32) -> (i32, i32) {
    %c0_i32 = arith.constant 0 : i32
    %c0_i32_0 = arith.constant 0 : i32
    %c0_i32_1 = arith.constant 0 : i32
    return %c0_i32, %c0_i32_0 : i32, i32
  }
  func.func @transform_2(%arg0: i32, %arg1: i32) -> (i32, i32) {
    %c0_i32 = arith.constant 0 : i32
    %c0_i32_0 = arith.constant 0 : i32
    %c0_i32_1 = arith.constant 0 : i32
    return %c0_i32, %c0_i32_0 : i32, i32
  }
  func.func @transform_3(%arg0: i32, %arg1: i32) -> (i32, i32) {
    %c0_i32 = arith.constant 0 : i32
    %c0_i32_0 = arith.constant 0 : i32
    %c0_i32_1 = arith.constant 0 : i32
    return %c0_i32, %c0_i32_0 : i32, i32
  }
  func.func @transform_4(%arg0: i32, %arg1: i32) -> (i32, i32) {
    %c0_i32 = arith.constant 0 : i32
    return %arg0, %arg1 : i32, i32
  }
}

</mosaic_0001>

<llo_original>
// kernel: tpu_custom_call.1
$region0: #{tpu_custom_call.1}
  #allocation0 [shape = 'u32[]', space=smem, size = 0x4, offset = 0x4, fixed_abs, tag = 'smem constant byte address 0x4 - core index']
  #allocation1 [shape = 'u32[72,128]{1,0:T(1,128)}', space=vmem, size = 0x9000, scoped, tag = 'internal scratch']
  #allocation2 [shape = 'f32[2,32]{1,0:T(2,128)}', space=vmem, size = 0x400, scoped, tag = 'scratch operand']
  #allocation3 [shape = 'f32[2,32]{1,0:T(2,128)}', space=vmem, size = 0x400, scoped, tag = 'scratch operand']
  #allocation4 [shape = 'f32[8,2,128]{2,1,0:T(2,128)}', space=vmem, size = 0x2000, scoped, tag = 'scratch operand']
  %s0 = inlined_call_operand.hbm [shape: f32[8,2,16], index: 0, kind: input, shape index: {}]
  %s1 = inlined_call_operand.hbm [shape: f32[16,128], index: 1, kind: input, shape index: {}]
  %s2 = inlined_call_operand.hbm [shape: f32[32,128], index: 2, kind: input, shape index: {}]
  %s3 = inlined_call_operand.vmem [shape: f32[1,128], index: 3, kind: input, shape index: {}]
  %s4 = inlined_call_operand.hbm [shape: f32[2,256], index: 4, kind: output, shape index: {}]
  %s5 = sld [smem:[#allocation0]]
  $region42: #{tpu_custom_call.1} parent=0
    _
  %s7 = ssub.s32 1, %s5
  %s8 = scalar_select 0, %s7, %s5
  $region1: #{tpu_custom_call.1} parent=0
    #allocation5 [shape = 'u8[8192]{0}', space=vmem, size = 0x2000, scoped, tag = 'input window, operand 0, single buffered']
    #allocation6 [shape = 's32[1]{0}', space=sflag, size = 0x4, scoped, tag = 'scoped memory for tpu_custom_call.1']
    #allocation7 [shape = 's32[1]{0}', space=sflag, size = 0x4, scoped, tag = 'scoped memory for tpu_custom_call.1']
    #allocation8 [shape = 'u8[8192]{0}', space=vmem, size = 0x2000, scoped, tag = 'input window, operand 1, single buffered']
    #allocation9 [shape = 's32[1]{0}', space=sflag, size = 0x4, scoped, tag = 'scoped memory for tpu_custom_call.1']
    #allocation10 [shape = 'u8[16384]{0}', space=vmem, size = 0x4000, scoped, tag = 'input window, operand 2, single buffered']
    #allocation11 [shape = 'u8[2048]{0}', space=vmem, size = 0x800, scoped, tag = 'output window, operand 0, single buffered']
    %9 = vsyncpa [#allocation6], 0
    %10 = vsyncpa [#allocation9], 0
    %11 = vsyncpa [#allocation7], 0
    // Predicated region
    $region2: #{tpu_custom_call.1} parent=1 // pred_check
      _
    $region3: #{tpu_custom_call.1} parent=1 // pred_check_branch
      %13 = sbr.rel (0) target = $region5
    $region4: #{tpu_custom_call.1} parent=1 // pred_region
      %15 = vsyncadd [#allocation6], 0
      %s16 = sshll.u32 %s0, 4
      %s17 = int_to_ptr.hbm [resolvable:$true] %s16
      %s18 = sshll.u32 [#allocation5], 4
      %s19 = int_to_ptr.vmem [resolvable:$true] %s18
      %24 = dma.hbm_to_vmem [thread:$0]  %s17, 256, %s19, [#allocation6], 32, 32, 2
    $region5: #{tpu_custom_call.1} parent=1 // pred_fallthru
      _
    // Predicated region
    $region6: #{tpu_custom_call.1} parent=1 // pred_check
      _
    $region7: #{tpu_custom_call.1} parent=1 // pred_check_branch
      %26 = sbr.rel (0) target = $region9
    $region8: #{tpu_custom_call.1} parent=1 // pred_region
      %28 = vsyncadd [#allocation9], 0
      %s29 = sshll.u32 %s1, 4
      %s30 = int_to_ptr.hbm [resolvable:$true] %s29
      %s31 = sshll.u32 [#allocation8], 4
      %s32 = int_to_ptr.vmem [resolvable:$true] %s31
      %37 = dma.hbm_to_vmem [thread:$0]  %s30, 256, %s32, [#allocation9], 128, 128, 8
    $region9: #{tpu_custom_call.1} parent=1 // pred_fallthru
      _
    // Predicated region
    $region10: #{tpu_custom_call.1} parent=1 // pred_check
      _
    $region11: #{tpu_custom_call.1} parent=1 // pred_check_branch
      %39 = sbr.rel (0) target = $region13
    $region12: #{tpu_custom_call.1} parent=1 // pred_region
      %41 = vsyncadd [#allocation9], 0
      %s42 = sshll.u32 %s2, 4
      %s43 = int_to_ptr.hbm [resolvable:$true] %s42
      %s44 = sshll.u32 [#allocation10], 4
      %s45 = int_to_ptr.vmem [resolvable:$true] %s44
      %50 = dma.hbm_to_vmem [thread:$0]  %s43, 512, %s45, [#allocation9], 128, 128, 8
    $region13: #{tpu_custom_call.1} parent=1 // pred_fallthru
      _
    // Predicated region
    $region14: #{tpu_custom_call.1} parent=1 // pred_check
      _
    $region15: #{tpu_custom_call.1} parent=1 // pred_check_branch
      %52 = sbr.rel (0) target = $region17
    $region16: #{tpu_custom_call.1} parent=1 // pred_region
      _
    $region17: #{tpu_custom_call.1} parent=1 // pred_fallthru
      _
    // Predicated region
    $region18: #{tpu_custom_call.1} parent=1 // pred_check
      _
    $region19: #{tpu_custom_call.1} parent=1 // pred_check_branch
      %54 = sbr.rel (0) target = $region21
    $region20: #{tpu_custom_call.1} parent=1 // pred_region
      %56 = dma.done [#allocation6], 256
    $region21: #{tpu_custom_call.1} parent=1 // pred_fallthru
      _
    // Predicated region
    $region22: #{tpu_custom_call.1} parent=1 // pred_check
      _
    $region23: #{tpu_custom_call.1} parent=1 // pred_check_branch
      %58 = sbr.rel (0) target = $region25
    $region24: #{tpu_custom_call.1} parent=1 // pred_region
      %60 = dma.done [#allocation9], 256
    $region25: #{tpu_custom_call.1} parent=1 // pred_fallthru
      _
    // Predicated region
    $region26: #{tpu_custom_call.1} parent=1 // pred_check
      _
    $region27: #{tpu_custom_call.1} parent=1 // pred_check_branch
      %62 = sbr.rel (0) target = $region29
    $region28: #{tpu_custom_call.1} parent=1 // pred_region
      %64 = dma.done [#allocation9], 512
    $region29: #{tpu_custom_call.1} parent=1 // pred_fallthru
      _
    %p65 = scmp.eq.s32.totalorder 0, 0
    // Predicated region
    $region30: #{tpu_custom_call.1} parent=1 // pred_check
      %p66 = pneg %p65
    $region31: #{tpu_custom_call.1} parent=1 // pred_check_branch
      %68 = sbr.rel (%p66) target = $region33
    $region32: #{tpu_custom_call.1} parent=1 // pred_region
      %vm69 = vcmask 254976
      %70 = vst.msk [vmem:[#allocation2] sm:$0x3] %vm69, 0.0
      %71 = vst.msk [vmem:[#allocation3] sm:$0x3] %vm69, 0.0
    $region33: #{tpu_custom_call.1} parent=1 // pred_fallthru
      _
    %v72 = vld [vmem:[#allocation5] sm:$0x3]
    %v73 = vld [vmem:[#allocation5 + $0x2] sm:$0x3]
    %v74 = vld [vmem:[#allocation5 + $0x4] sm:$0x3]
    %v75 = vld [vmem:[#allocation5 + $0x6] sm:$0x3]
    %v76 = vld [vmem:[#allocation5 + $0x8] sm:$0x3]
    %v77 = vld [vmem:[#allocation5 + $0xa] sm:$0x3]
    %v78 = vld [vmem:[#allocation5 + $0xc] sm:$0x3]
    %v79 = vld [vmem:[#allocation5 + $0xe] sm:$0x3]
    %v80 = vld [vmem:[#allocation8] sm:$0xff]
    %v81 = vld [vmem:[#allocation8 + $0x8] sm:$0xff]
    %v82 = vld [vmem:[%s3] sm:$0x1]
    %v84 = vperm.slane %v82, 0
    %94 = vst [vmem:[#allocation1] ss:$4 sm:$0xff] %v72
    %s95 = scalar_lea.vmem [#allocation1], 1
    %96 = vst [vmem:[%s95] ss:$4 sm:$0xff] %v73
    %s97 = scalar_lea.vmem [#allocation1], 2
    %98 = vst [vmem:[%s97] ss:$4 sm:$0xff] %v74
    %s99 = scalar_lea.vmem [#allocation1], 3
    %100 = vst [vmem:[%s99] ss:$4 sm:$0xff] %v75
    %s101 = scalar_lea.vmem [#allocation1], 32
    %102 = vst [vmem:[%s101] ss:$4 sm:$0xff] %v76
    %s103 = scalar_lea.vmem [#allocation1], 33
    %104 = vst [vmem:[%s103] ss:$4 sm:$0xff] %v77
    %s105 = scalar_lea.vmem [#allocation1], 34
    %106 = vst [vmem:[%s105] ss:$4 sm:$0xff] %v78
    %s107 = scalar_lea.vmem [#allocation1], 35
    %108 = vst [vmem:[%s107] ss:$4 sm:$0xff] %v79
    %v109 = vld.sshfl [vmem:[#allocation1] sm:$0xff pattern:$0x73625140]
    %v110 = vld.sshfl [vmem:[#allocation1 + $0x20] sm:$0xff pattern:$0x73625140]
    %vm111 = vcmask 130048
    %v112 = vsel %vm111, %v109, 0
    %v114 = vsel %vm111, %v110, 0
    %116 = vmatpush.msra.mxu0 0.0
    %117 = vmatpush.msra.mxu0 0.0
    %118 = vmatpush.msra.mxu0 0.0
    %119 = vmatpush.msra.mxu0 0.0
    %120 = vmatpush.msra.mxu0 0.0
    %121 = vmatpush.msra.mxu0 0.0
    %122 = vmatpush.msra.mxu0 0.0
    %123 = vmatpush.msra.mxu0 0.0
    %124 = vmatpush.msra.mxu0 0.0
    %125 = vmatpush.msra.mxu0 0.0
    %126 = vmatpush.msra.mxu0 0.0
    %127 = vmatpush.msra.mxu0 0.0
    %128 = vmatpush.msra.mxu0 0.0
    %129 = vmatpush.msra.mxu0 0.0
    %130 = vmatpush.msra.mxu0 %v81
    %131 = vmatpush.msra.mxu0 %v80
    %132 = vmatmul.f32.gmra.mxu0 %v112
    %v133 = vpop.f32.mrf.mxu0
    %v134 = vadd.f32 %v84, %v133
    %135 = vmatmul.f32.gmra.mxu0 %v114
    %v136 = vpop.f32.mrf.mxu0
    %v137 = vadd.f32 %v84, %v136
    %138 = vdwg.mxu0
    %v141 = vrot.slane %v134, 2
    %v142 = vrot.slane %v134, 4
    %v143 = vrot.slane %v134, 6
    %v144 = vrot.slane %v137, 2
    %v145 = vrot.slane %v137, 4
    %v146 = vrot.slane %v137, 6
    %153 = vst [vmem:[#allocation4] sm:$0x3] %v134
    %154 = vst [vmem:[#allocation4 + $0x2] sm:$0x3] %v141
    %155 = vst [vmem:[#allocation4 + $0x4] sm:$0x3] %v142
    %156 = vst [vmem:[#allocation4 + $0x6] sm:$0x3] %v143
    %157 = vst [vmem:[#allocation4 + $0x8] sm:$0x3] %v137
    %158 = vst [vmem:[#allocation4 + $0xa] sm:$0x3] %v144
    %159 = vst [vmem:[#allocation4 + $0xc] sm:$0x3] %v145
    %160 = vst [vmem:[#allocation4 + $0xe] sm:$0x3] %v146
    %v161 = vld [vmem:[#allocation10] sm:$0xff]
    %v162 = vld [vmem:[#allocation10 + $0x8] sm:$0xff]
    %v163 = vld [vmem:[#allocation10 + $0x10] sm:$0xff]
    %v164 = vld [vmem:[#allocation10 + $0x18] sm:$0xff]
    %v165 = vld [vmem:[#allocation2] sm:$0x3]
    %v166 = vld [vmem:[#allocation3] sm:$0x3]
    %s167 = smul.u32 0, 2
    %s168 = scalar_lea.vmem [#allocation4], %s167
    %v169 = vld [vmem:[%s168] sm:$0x3]
    %vm170 = vcmask 261120
    %v172 = vsel %vm170, %v165, 0
    %174 = vmatpush.msra.mxu0 0.0
    %175 = vmatpush.msra.mxu0 0.0
    %176 = vmatpush.msra.mxu0 0.0
    %177 = vmatpush.msra.mxu0 0.0
    %178 = vmatpush.msra.mxu0 0.0
    %179 = vmatpush.msra.mxu0 0.0
    %180 = vmatpush.msra.mxu0 0.0
    %181 = vmatpush.msra.mxu0 0.0
    %182 = vmatpush.msra.mxu0 0.0
    %183 = vmatpush.msra.mxu0 0.0
    %184 = vmatpush.msra.mxu0 0.0
    %185 = vmatpush.msra.mxu0 0.0
    %186 = vmatpush.msra.mxu0 %v164
    %187 = vmatpush.msra.mxu0 %v163
    %188 = vmatpush.msra.mxu0 %v162
    %189 = vmatpush.msra.mxu0 %v161
    %190 = vmatmul.f32.gmra.mxu0 %v172
    %v191 = vpop.f32.mrf.mxu0
    %v192 = vadd.f32 0.0, %v191
    %193 = vdwg.mxu0
    %v194 = vadd.f32 %v169, %v192
    %v195 = vxor.u32 %v194, 2147483648
    %v196 = vmul.f32 %v195, 1.442695
    %v197 = vpow.pop %v196
    %v198 = vadd.f32 %v197, 1.0
    %v199 = vrcp.pop %v198
    %v200 = vmul.f32 %v198, %v199
    %v201 = vsub.f32 1.0, %v200
    %v202 = vmul.f32 %v199, %v201
    %v203 = vadd.f32 %v199, %v202
    %vm204 = vweird.f32 %v198
    %vm205 = vweird.f32 %v199
    %vm206 = vmor %vm204, %vm205
    %v207 = vsel %vm206, %v199, %v203
    %v208 = vand.u32 2147483647, %v198
    %vm209 = vcmp.eq.f32.partialorder %v208, 8.507059e+37
    %v210 = vand.u32 %v198, 2147483648
    %v211 = vor.u32 1.1754944e-38, %v210
    %v212 = vsel %vm209, %v211, %v207
    %v213 = vmul.f32 1.0, %v212
    %v214 = vtanh.pop %v194
    %216 = vrot.lane.b32.xlu0 %v166, 32
    %v217 = vpop.permute.xlu0 %216
    %v219 = vmul.f32 %v213, %v217
    %221 = vrot.lane.b32.xlu0 %v214, 64
    %v222 = vpop.permute.xlu0 %221
    %v224 = vmul.f32 %v213, %v222
    %226 = vrot.lane.b32.xlu0 %v224, 32
    %v227 = vpop.permute.xlu0 %226
    %v229 = vadd.f32 %v219, %v227
    %v230 = vtanh.pop %v229
    %232 = vrot.lane.b32.xlu0 %v230, 64
    %v233 = vpop.permute.xlu0 %232
    %v235 = vmul.f32 %v213, %v233
    %s236 = sadd.s32 0, 1
    %s237 = smul.u32 %s236, 2
    %s238 = scalar_lea.vmem [#allocation4], %s237
    %v239 = vld [vmem:[%s238] sm:$0x3]
    %241 = vrot.lane.b32.xlu0 %v235, 32
    %v242 = vpop.permute.xlu0 %241
    %v243 = vsel %vm170, %v242, 0
    %245 = vmatpush.msra.mxu0 0.0
    %246 = vmatpush.msra.mxu0 0.0
    %247 = vmatpush.msra.mxu0 0.0
    %248 = vmatpush.msra.mxu0 0.0
    %249 = vmatpush.msra.mxu0 0.0
    %250 = vmatpush.msra.mxu0 0.0
    %251 = vmatpush.msra.mxu0 0.0
    %252 = vmatpush.msra.mxu0 0.0
    %253 = vmatpush.msra.mxu0 0.0
    %254 = vmatpush.msra.mxu0 0.0
    %255 = vmatpush.msra.mxu0 0.0
    %256 = vmatpush.msra.mxu0 0.0
    %257 = vmatpush.msra.mxu0 %v164
    %258 = vmatpush.msra.mxu0 %v163
    %259 = vmatpush.msra.mxu0 %v162
    %260 = vmatpush.msra.mxu0 %v161
    %261 = vmatmul.f32.gmra.mxu0 %v243
    %v262 = vpop.f32.mrf.mxu0
    %v263 = vadd.f32 0.0, %v262
    %264 = vdwg.mxu0
    %v265 = vadd.f32 %v239, %v263
    %v266 = vxor.u32 %v265, 2147483648
    %v267 = vmul.f32 %v266, 1.442695
    %v268 = vpow.pop %v267
    %v269 = vadd.f32 %v268, 1.0
    %v270 = vrcp.pop %v269
    %v271 = vmul.f32 %v269, %v270
    %v272 = vsub.f32 1.0, %v271
    %v273 = vmul.f32 %v270, %v272
    %v274 = vadd.f32 %v270, %v273
    %vm275 = vweird.f32 %v269
    %vm276 = vweird.f32 %v270
    %vm277 = vmor %vm275, %vm276
    %v278 = vsel %vm277, %v270, %v274
    %v279 = vand.u32 2147483647, %v269
    %vm280 = vcmp.eq.f32.partialorder %v279, 8.507059e+37
    %v281 = vand.u32 %v269, 2147483648
    %v282 = vor.u32 1.1754944e-38, %v281
    %v283 = vsel %vm280, %v282, %v278
    %v284 = vmul.f32 1.0, %v283
    %v285 = vtanh.pop %v265
    %v286 = vmul.f32 %v284, %v229
    %288 = vrot.lane.b32.xlu0 %v285, 64
    %v289 = vpop.permute.xlu0 %288
    %v291 = vmul.f32 %v284, %v289
    %293 = vrot.lane.b32.xlu0 %v291, 32
    %v294 = vpop.permute.xlu0 %293
    %v296 = vadd.f32 %v286, %v294
    %v297 = vtanh.pop %v296
    %299 = vrot.lane.b32.xlu0 %v297, 64
    %v300 = vpop.permute.xlu0 %299
    %v302 = vmul.f32 %v284, %v300
    %s303 = sadd.s32 0, 2
    %s304 = smul.u32 %s303, 2
    %s305 = scalar_lea.vmem [#allocation4], %s304
    %v306 = vld [vmem:[%s305] sm:$0x3]
    %308 = vrot.lane.b32.xlu0 %v302, 32
    %v309 = vpop.permute.xlu0 %308
    %v310 = vsel %vm170, %v309, 0
    %312 = vmatpush.msra.mxu0 0.0
    %313 = vmatpush.msra.mxu0 0.0
    %314 = vmatpush.msra.mxu0 0.0
    %315 = vmatpush.msra.mxu0 0.0
    %316 = vmatpush.msra.mxu0 0.0
    %317 = vmatpush.msra.mxu0 0.0
    %318 = vmatpush.msra.mxu0 0.0
    %319 = vmatpush.msra.mxu0 0.0
    %320 = vmatpush.msra.mxu0 0.0
    %321 = vmatpush.msra.mxu0 0.0
    %322 = vmatpush.msra.mxu0 0.0
    %323 = vmatpush.msra.mxu0 0.0
    %324 = vmatpush.msra.mxu0 %v164
    %325 = vmatpush.msra.mxu0 %v163
    %326 = vmatpush.msra.mxu0 %v162
    %327 = vmatpush.msra.mxu0 %v161
    %328 = vmatmul.f32.gmra.mxu0 %v310
    %v329 = vpop.f32.mrf.mxu0
    %v330 = vadd.f32 0.0, %v329
    %331 = vdwg.mxu0
    %v332 = vadd.f32 %v306, %v330
    %v333 = vxor.u32 %v332, 2147483648
    %v334 = vmul.f32 %v333, 1.442695
    %v335 = vpow.pop %v334
    %v336 = vadd.f32 %v335, 1.0
    %v337 = vrcp.pop %v336
    %v338 = vmul.f32 %v336, %v337
    %v339 = vsub.f32 1.0, %v338
    %v340 = vmul.f32 %v337, %v339
    %v341 = vadd.f32 %v337, %v340
    %vm342 = vweird.f32 %v336
    %vm343 = vweird.f32 %v337
    %vm344 = vmor %vm342, %vm343
    %v345 = vsel %vm344, %v337, %v341
    %v346 = vand.u32 2147483647, %v336
    %vm347 = vcmp.eq.f32.partialorder %v346, 8.507059e+37
    %v348 = vand.u32 %v336, 2147483648
    %v349 = vor.u32 1.1754944e-38, %v348
    %v350 = vsel %vm347, %v349, %v345
    %v351 = vmul.f32 1.0, %v350
    %v352 = vtanh.pop %v332
    %v353 = vmul.f32 %v351, %v296
    %355 = vrot.lane.b32.xlu0 %v352, 64
    %v356 = vpop.permute.xlu0 %355
    %v358 = vmul.f32 %v351, %v356
    %360 = vrot.lane.b32.xlu0 %v358, 32
    %v361 = vpop.permute.xlu0 %360
    %v363 = vadd.f32 %v353, %v361
    %v364 = vtanh.pop %v363
    %366 = vrot.lane.b32.xlu0 %v364, 64
    %v367 = vpop.permute.xlu0 %366
    %v369 = vmul.f32 %v351, %v367
    %s370 = sadd.s32 0, 3
    %s371 = smul.u32 %s370, 2
    %s372 = scalar_lea.vmem [#allocation4], %s371
    %v373 = vld [vmem:[%s372] sm:$0x3]
    %375 = vrot.lane.b32.xlu0 %v369, 32
    %v376 = vpop.permute.xlu0 %375
    %v377 = vsel %vm170, %v376, 0
    %379 = vmatpush.msra.mxu0 0.0
    %380 = vmatpush.msra.mxu0 0.0
    %381 = vmatpush.msra.mxu0 0.0
    %382 = vmatpush.msra.mxu0 0.0
    %383 = vmatpush.msra.mxu0 0.0
    %384 = vmatpush.msra.mxu0 0.0
    %385 = vmatpush.msra.mxu0 0.0
    %386 = vmatpush.msra.mxu0 0.0
    %387 = vmatpush.msra.mxu0 0.0
    %388 = vmatpush.msra.mxu0 0.0
    %389 = vmatpush.msra.mxu0 0.0
    %390 = vmatpush.msra.mxu0 0.0
    %391 = vmatpush.msra.mxu0 %v164
    %392 = vmatpush.msra.mxu0 %v163
    %393 = vmatpush.msra.mxu0 %v162
    %394 = vmatpush.msra.mxu0 %v161
    %395 = vmatmul.f32.gmra.mxu0 %v377
    %v396 = vpop.f32.mrf.mxu0
    %v397 = vadd.f32 0.0, %v396
    %398 = vdwg.mxu0
    %v399 = vadd.f32 %v373, %v397
    %v400 = vxor.u32 %v399, 2147483648
    %v401 = vmul.f32 %v400, 1.442695
    %v402 = vpow.pop %v401
    %v403 = vadd.f32 %v402, 1.0
    %v404 = vrcp.pop %v403
    %v405 = vmul.f32 %v403, %v404
    %v406 = vsub.f32 1.0, %v405
    %v407 = vmul.f32 %v404, %v406
    %v408 = vadd.f32 %v404, %v407
    %vm409 = vweird.f32 %v403
    %vm410 = vweird.f32 %v404
    %vm411 = vmor %vm409, %vm410
    %v412 = vsel %vm411, %v404, %v408
    %v413 = vand.u32 2147483647, %v403
    %vm414 = vcmp.eq.f32.partialorder %v413, 8.507059e+37
    %v415 = vand.u32 %v403, 2147483648
    %v416 = vor.u32 1.1754944e-38, %v415
    %v417 = vsel %vm414, %v416, %v412
    %v418 = vmul.f32 1.0, %v417
    %v419 = vtanh.pop %v399
    %v420 = vmul.f32 %v418, %v363
    %422 = vrot.lane.b32.xlu0 %v419, 64
    %v423 = vpop.permute.xlu0 %422
    %v425 = vmul.f32 %v418, %v423
    %427 = vrot.lane.b32.xlu0 %v425, 32
    %v428 = vpop.permute.xlu0 %427
    %v430 = vadd.f32 %v420, %v428
    %v431 = vtanh.pop %v430
    %433 = vrot.lane.b32.xlu0 %v431, 64
    %v434 = vpop.permute.xlu0 %433
    %v436 = vmul.f32 %v418, %v434
    %438 = vrot.lane.b32.xlu0 %v302, 64
    %v439 = vpop.permute.xlu0 %438
    %441 = vrot.lane.b32.xlu0 %v369, 96
    %v442 = vpop.permute.xlu0 %441
    %v444 = vsel %vm170, %v242, %v439
    %vm445 = vcmask 523264
    %v446 = vsel %vm445, %v444, %v442
    %vm447 = vcmask 785408
    %v448 = vsel %vm447, %v446, %v436
    %449 = vst [vmem:[#allocation11] sm:$0x3] %v448
    %s450 = smul.u32 4, 2
    %s451 = scalar_lea.vmem [#allocation4], %s450
    %v452 = vld [vmem:[%s451] sm:$0x3]
    %454 = vrot.lane.b32.xlu0 %v436, 32
    %v455 = vpop.permute.xlu0 %454
    %v456 = vsel %vm170, %v455, 0
    %458 = vmatpush.msra.mxu0 0.0
    %459 = vmatpush.msra.mxu0 0.0
    %460 = vmatpush.msra.mxu0 0.0
    %461 = vmatpush.msra.mxu0 0.0
    %462 = vmatpush.msra.mxu0 0.0
    %463 = vmatpush.msra.mxu0 0.0
    %464 = vmatpush.msra.mxu0 0.0
    %465 = vmatpush.msra.mxu0 0.0
    %466 = vmatpush.msra.mxu0 0.0
    %467 = vmatpush.msra.mxu0 0.0
    %468 = vmatpush.msra.mxu0 0.0
    %469 = vmatpush.msra.mxu0 0.0
    %470 = vmatpush.msra.mxu0 %v164
    %471 = vmatpush.msra.mxu0 %v163
    %472 = vmatpush.msra.mxu0 %v162
    %473 = vmatpush.msra.mxu0 %v161
    %474 = vmatmul.f32.gmra.mxu0 %v456
    %v475 = vpop.f32.mrf.mxu0
    %v476 = vadd.f32 0.0, %v475
    %477 = vdwg.mxu0
    %v478 = vadd.f32 %v452, %v476
    %v479 = vxor.u32 %v478, 2147483648
    %v480 = vmul.f32 %v479, 1.442695
    %v481 = vpow.pop %v480
    %v482 = vadd.f32 %v481, 1.0
    %v483 = vrcp.pop %v482
    %v484 = vmul.f32 %v482, %v483
    %v485 = vsub.f32 1.0, %v484
    %v486 = vmul.f32 %v483, %v485
    %v487 = vadd.f32 %v483, %v486
    %vm488 = vweird.f32 %v482
    %vm489 = vweird.f32 %v483
    %vm490 = vmor %vm488, %vm489
    %v491 = vsel %vm490, %v483, %v487
    %v492 = vand.u32 2147483647, %v482
    %vm493 = vcmp.eq.f32.partialorder %v492, 8.507059e+37
    %v494 = vand.u32 %v482, 2147483648
    %v495 = vor.u32 1.1754944e-38, %v494
    %v496 = vsel %vm493, %v495, %v491
    %v497 = vmul.f32 1.0, %v496
    %v498 = vtanh.pop %v478
    %v499 = vmul.f32 %v497, %v430
    %501 = vrot.lane.b32.xlu0 %v498, 64
    %v502 = vpop.permute.xlu0 %501
    %v504 = vmul.f32 %v497, %v502
    %506 = vrot.lane.b32.xlu0 %v504, 32
    %v507 = vpop.permute.xlu0 %506
    %v509 = vadd.f32 %v499, %v507
    %v510 = vtanh.pop %v509
    %512 = vrot.lane.b32.xlu0 %v510, 64
    %v513 = vpop.permute.xlu0 %512
    %v515 = vmul.f32 %v497, %v513
    %s516 = sadd.s32 4, 1
    %s517 = smul.u32 %s516, 2
    %s518 = scalar_lea.vmem [#allocation4], %s517
    %v519 = vld [vmem:[%s518] sm:$0x3]
    %521 = vrot.lane.b32.xlu0 %v515, 32
    %v522 = vpop.permute.xlu0 %521
    %v523 = vsel %vm170, %v522, 0
    %525 = vmatpush.msra.mxu0 0.0
    %526 = vmatpush.msra.mxu0 0.0
    %527 = vmatpush.msra.mxu0 0.0
    %528 = vmatpush.msra.mxu0 0.0
    %529 = vmatpush.msra.mxu0 0.0
    %530 = vmatpush.msra.mxu0 0.0
    %531 = vmatpush.msra.mxu0 0.0
    %532 = vmatpush.msra.mxu0 0.0
    %533 = vmatpush.msra.mxu0 0.0
    %534 = vmatpush.msra.mxu0 0.0
    %535 = vmatpush.msra.mxu0 0.0
    %536 = vmatpush.msra.mxu0 0.0
    %537 = vmatpush.msra.mxu0 %v164
    %538 = vmatpush.msra.mxu0 %v163
    %539 = vmatpush.msra.mxu0 %v162
    %540 = vmatpush.msra.mxu0 %v161
    %541 = vmatmul.f32.gmra.mxu0 %v523
    %v542 = vpop.f32.mrf.mxu0
    %v543 = vadd.f32 0.0, %v542
    %544 = vdwg.mxu0
    %v545 = vadd.f32 %v519, %v543
    %v546 = vxor.u32 %v545, 2147483648
    %v547 = vmul.f32 %v546, 1.442695
    %v548 = vpow.pop %v547
    %v549 = vadd.f32 %v548, 1.0
    %v550 = vrcp.pop %v549
    %v551 = vmul.f32 %v549, %v550
    %v552 = vsub.f32 1.0, %v551
    %v553 = vmul.f32 %v550, %v552
    %v554 = vadd.f32 %v550, %v553
    %vm555 = vweird.f32 %v549
    %vm556 = vweird.f32 %v550
    %vm557 = vmor %vm555, %vm556
    %v558 = vsel %vm557, %v550, %v554
    %v559 = vand.u32 2147483647, %v549
    %vm560 = vcmp.eq.f32.partialorder %v559, 8.507059e+37
    %v561 = vand.u32 %v549, 2147483648
    %v562 = vor.u32 1.1754944e-38, %v561
    %v563 = vsel %vm560, %v562, %v558
    %v564 = vmul.f32 1.0, %v563
    %v565 = vtanh.pop %v545
    %v566 = vmul.f32 %v564, %v509
    %568 = vrot.lane.b32.xlu0 %v565, 64
    %v569 = vpop.permute.xlu0 %568
    %v571 = vmul.f32 %v564, %v569
    %573 = vrot.lane.b32.xlu0 %v571, 32
    %v574 = vpop.permute.xlu0 %573
    %v576 = vadd.f32 %v566, %v574
    %v577 = vtanh.pop %v576
    %579 = vrot.lane.b32.xlu0 %v577, 64
    %v580 = vpop.permute.xlu0 %579
    %v582 = vmul.f32 %v564, %v580
    %s583 = sadd.s32 4, 2
    %s584 = smul.u32 %s583, 2
    %s585 = scalar_lea.vmem [#allocation4], %s584
    %v586 = vld [vmem:[%s585] sm:$0x3]
    %588 = vrot.lane.b32.xlu0 %v582, 32
    %v589 = vpop.permute.xlu0 %588
    %v590 = vsel %vm170, %v589, 0
    %592 = vmatpush.msra.mxu0 0.0
    %593 = vmatpush.msra.mxu0 0.0
    %594 = vmatpush.msra.mxu0 0.0
    %595 = vmatpush.msra.mxu0 0.0
    %596 = vmatpush.msra.mxu0 0.0
    %597 = vmatpush.msra.mxu0 0.0
    %598 = vmatpush.msra.mxu0 0.0
    %599 = vmatpush.msra.mxu0 0.0
    %600 = vmatpush.msra.mxu0 0.0
    %601 = vmatpush.msra.mxu0 0.0
    %602 = vmatpush.msra.mxu0 0.0
    %603 = vmatpush.msra.mxu0 0.0
    %604 = vmatpush.msra.mxu0 %v164
    %605 = vmatpush.msra.mxu0 %v163
    %606 = vmatpush.msra.mxu0 %v162
    %607 = vmatpush.msra.mxu0 %v161
    %608 = vmatmul.f32.gmra.mxu0 %v590
    %v609 = vpop.f32.mrf.mxu0
    %v610 = vadd.f32 0.0, %v609
    %611 = vdwg.mxu0
    %v612 = vadd.f32 %v586, %v610
    %v613 = vxor.u32 %v612, 2147483648
    %v614 = vmul.f32 %v613, 1.442695
    %v615 = vpow.pop %v614
    %v616 = vadd.f32 %v615, 1.0
    %v617 = vrcp.pop %v616
    %v618 = vmul.f32 %v616, %v617
    %v619 = vsub.f32 1.0, %v618
    %v620 = vmul.f32 %v617, %v619
    %v621 = vadd.f32 %v617, %v620
    %vm622 = vweird.f32 %v616
    %vm623 = vweird.f32 %v617
    %vm624 = vmor %vm622, %vm623
    %v625 = vsel %vm624, %v617, %v621
    %v626 = vand.u32 2147483647, %v616
    %vm627 = vcmp.eq.f32.partialorder %v626, 8.507059e+37
    %v628 = vand.u32 %v616, 2147483648
    %v629 = vor.u32 1.1754944e-38, %v628
    %v630 = vsel %vm627, %v629, %v625
    %v631 = vmul.f32 1.0, %v630
    %v632 = vtanh.pop %v612
    %v633 = vmul.f32 %v631, %v576
    %635 = vrot.lane.b32.xlu0 %v632, 64
    %v636 = vpop.permute.xlu0 %635
    %v638 = vmul.f32 %v631, %v636
    %640 = vrot.lane.b32.xlu0 %v638, 32
    %v641 = vpop.permute.xlu0 %640
    %v643 = vadd.f32 %v633, %v641
    %v644 = vtanh.pop %v643
    %646 = vrot.lane.b32.xlu0 %v644, 64
    %v647 = vpop.permute.xlu0 %646
    %v649 = vmul.f32 %v631, %v647
    %s650 = sadd.s32 4, 3
    %s651 = smul.u32 %s650, 2
    %s652 = scalar_lea.vmem [#allocation4], %s651
    %v653 = vld [vmem:[%s652] sm:$0x3]
    %655 = vrot.lane.b32.xlu0 %v649, 32
    %v656 = vpop.permute.xlu0 %655
    %v657 = vsel %vm170, %v656, 0
    %659 = vmatpush.msra.mxu0 0.0
    %660 = vmatpush.msra.mxu0 0.0
    %661 = vmatpush.msra.mxu0 0.0
    %662 = vmatpush.msra.mxu0 0.0
    %663 = vmatpush.msra.mxu0 0.0
    %664 = vmatpush.msra.mxu0 0.0
    %665 = vmatpush.msra.mxu0 0.0
    %666 = vmatpush.msra.mxu0 0.0
    %667 = vmatpush.msra.mxu0 0.0
    %668 = vmatpush.msra.mxu0 0.0
    %669 = vmatpush.msra.mxu0 0.0
    %670 = vmatpush.msra.mxu0 0.0
    %671 = vmatpush.msra.mxu0 %v164
    %672 = vmatpush.msra.mxu0 %v163
    %673 = vmatpush.msra.mxu0 %v162
    %674 = vmatpush.msra.mxu0 %v161
    %675 = vmatmul.f32.gmra.mxu0 %v657
    %v676 = vpop.f32.mrf.mxu0
    %v677 = vadd.f32 0.0, %v676
    %678 = vdwg.mxu0
    %v679 = vadd.f32 %v653, %v677
    %v680 = vxor.u32 %v679, 2147483648
    %v681 = vmul.f32 %v680, 1.442695
    %v682 = vpow.pop %v681
    %v683 = vadd.f32 %v682, 1.0
    %v684 = vrcp.pop %v683
    %v685 = vmul.f32 %v683, %v684
    %v686 = vsub.f32 1.0, %v685
    %v687 = vmul.f32 %v684, %v686
    %v688 = vadd.f32 %v684, %v687
    %vm689 = vweird.f32 %v683
    %vm690 = vweird.f32 %v684
    %vm691 = vmor %vm689, %vm690
    %v692 = vsel %vm691, %v684, %v688
    %v693 = vand.u32 2147483647, %v683
    %vm694 = vcmp.eq.f32.partialorder %v693, 8.507059e+37
    %v695 = vand.u32 %v683, 2147483648
    %v696 = vor.u32 1.1754944e-38, %v695
    %v697 = vsel %vm694, %v696, %v692
    %v698 = vmul.f32 1.0, %v697
    %v699 = vtanh.pop %v679
    %v700 = vmul.f32 %v698, %v643
    %702 = vrot.lane.b32.xlu0 %v699, 64
    %v703 = vpop.permute.xlu0 %702
    %v705 = vmul.f32 %v698, %v703
    %707 = vrot.lane.b32.xlu0 %v705, 32
    %v708 = vpop.permute.xlu0 %707
    %v710 = vadd.f32 %v700, %v708
    %v711 = vtanh.pop %v710
    %713 = vrot.lane.b32.xlu0 %v711, 64
    %v714 = vpop.permute.xlu0 %713
    %v716 = vmul.f32 %v698, %v714
    %718 = vrot.lane.b32.xlu0 %v582, 64
    %v719 = vpop.permute.xlu0 %718
    %721 = vrot.lane.b32.xlu0 %v649, 96
    %v722 = vpop.permute.xlu0 %721
    %v724 = vsel %vm170, %v522, %v719
    %v725 = vsel %vm445, %v724, %v722
    %v726 = vsel %vm447, %v725, %v716
    %s727 = scalar_lea.vmem [#allocation11], 2
    %728 = vst [vmem:[%s727] sm:$0x3] %v726
    %730 = vrot.lane.b32.xlu0 %v716, 32
    %v731 = vpop.permute.xlu0 %730
    %vm733 = vcmask 254976
    %734 = vst.msk [vmem:[#allocation2] sm:$0x3] %vm733, %v731
    %736 = vrot.lane.b32.xlu0 %v710, 96
    %v737 = vpop.permute.xlu0 %736
    %739 = vst.msk [vmem:[#allocation3] sm:$0x3] %vm733, %v737
    // Predicated region
    $region34: #{tpu_custom_call.1} parent=1 // pred_check
      _
    $region35: #{tpu_custom_call.1} parent=1 // pred_check_branch
      %741 = sbr.rel (0) target = $region37
    $region36: #{tpu_custom_call.1} parent=1 // pred_region
      %743 = vsyncadd [#allocation7], 0
      %s745 = sshll.u32 [#allocation11], 4
      %s746 = int_to_ptr.vmem [resolvable:$true] %s745
      %s747 = sshll.u32 %s4, 4
      %s748 = int_to_ptr.hbm [resolvable:$true] %s747
      %750 = dma.vmem_to_hbm [thread:$0]  %s746, 64, %s748, [#allocation7]
    $region37: #{tpu_custom_call.1} parent=1 // pred_fallthru
      _
    // Predicated region
    $region38: #{tpu_custom_call.1} parent=1 // pred_check
      _
    $region39: #{tpu_custom_call.1} parent=1 // pred_check_branch
      %752 = sbr.rel (0) target = $region41
    $region40: #{tpu_custom_call.1} parent=1 // pred_region
      %754 = dma.done [#allocation7], 64
    $region41: #{tpu_custom_call.1} parent=1 // pred_fallthru
      _
    %755 = vsyncpa [#allocation6], 1
    %756 = vsyncpa [#allocation9], 1
    %757 = vsyncpa [#allocation7], 1

</llo_original>
